<compile_context>
chip_gen: v6e
topology: v6e:2x2x1
jax: 0.10.0
libtpu: 0.0.40
codegen_flags: <defaults>
</compile_context>

<pallas_src>
import functools

import jax
import jax.numpy as jnp
from jax.experimental import pallas as pl
from jax.experimental.pallas import tpu as pltpu

_LANE = 128


def _round_up(x, m):
    return (x + m - 1) // m * m


def _choose_tile(dim, preferred):
    """Largest tile <= preferred that is a multiple of 8 and divides dim;
    falls back to the full extent (always legal for BlockSpec)."""
    t = min(int(preferred), dim)
    t = max(t - t % 8, 8)
    while t > 8 and dim % t:
        t -= 8
    return t if dim % t == 0 else dim


def _vmem_limit(tile_bytes):
    """~2x the live tile working set + headroom, clamped to [16 MiB, 64 MiB]
    (64 MiB = v7x physical VMEM per TensorCore)."""
    return int(min(max(2 * tile_bytes + (4 << 20), 16 << 20), 64 << 20))


# ---------------------------------------------------------------------------
# Kernel 1: fused projection  x -> (V, rotated-K)   (computed once per token)
# ---------------------------------------------------------------------------
def _proj_kernel(x_ref, w_ref, v_ref, k_ref, *, h_pad):
    """x(1,tp,M) f32 ; w(M,2*Hp) bf16 ; outputs v/k (1,tp,Hp) bf16.

    Columns [:, :Hp] of w -> V (un-rotated K(x), zero-padded to Hp lanes)
    Columns [:, Hp:] of w -> rotated keys (== queries), H**-0.25 folded in.
    The split at Hp (multiple of 128) is lane-tile aligned -> free.
    """
    x = x_ref[0].astype(jnp.bfloat16)                               # (tp, M)
    kv = jnp.dot(x, w_ref[...], preferred_element_type=jnp.float32)  # (tp, 2Hp)
    v_ref[0] = kv[:, :h_pad].astype(jnp.bfloat16)
    k_ref[0] = kv[:, h_pad:].astype(jnp.bfloat16)


# ---------------------------------------------------------------------------
# Kernel 2: causal flash attention over the pre-projected (bf16) k / v
# ---------------------------------------------------------------------------
def _flash_kernel(q_ref, k_ref, v_ref, o_ref, m_ref, l_ref, acc_ref, *, tq, tk):
    qi = pl.program_id(1)
    kj = pl.program_id(2)

    @pl.when(kj == 0)
    def _init():
        m_ref[...] = jnp.full_like(m_ref, -jnp.inf)
        l_ref[...] = jnp.zeros_like(l_ref)
        acc_ref[...] = jnp.zeros_like(acc_ref)

    q_start = qi * tq
    kv_start = kj * tk

    def _update(s):
        # Online-softmax update (f32 math; bf16 MXU operands, f32 accumulation).
        m_prev = m_ref[...]
        m_new = jnp.maximum(m_prev, jnp.max(s, axis=-1, keepdims=True))
        alpha = jnp.exp(m_prev - m_new)
        p = jnp.exp(s - m_new)
        l_ref[...] = alpha * l_ref[...] + jnp.sum(p, axis=-1, keepdims=True)
        acc_ref[...] = alpha * acc_ref[...] + jnp.dot(
            p.astype(jnp.bfloat16), v_ref[0], preferred_element_type=jnp.float32)
        m_ref[...] = m_new

    # Skip KV tiles strictly above the causal diagonal (fully masked).
    @pl.when(kv_start <= q_start + tq - 1)
    def _visible():
        # QK^T: contract the last (lane) dims directly; q == k for this module.
        s = jax.lax.dot_general(
            q_ref[0], k_ref[0],
            dimension_numbers=(((1,), (1,)), ((), ())),
            preferred_element_type=jnp.float32)                    # (tq, tk) f32

        crosses_diag = kv_start + tk - 1 > q_start

        @pl.when(crosses_diag)                  # diagonal tile: needs the mask
        def _masked():
            row = jax.lax.broadcasted_iota(jnp.int32, (tq, tk), 0) + q_start
            col = jax.lax.broadcasted_iota(jnp.int32, (tq, tk), 1) + kv_start
            _update(jnp.where(col <= row, s, -jnp.inf))

        @pl.when(jnp.logical_not(crosses_diag))  # fully below diagonal: no mask
        def _unmasked():
            _update(s)

    @pl.when(kj == pl.num_programs(2) - 1)
    def _finalize():
        # Exact divide (not approx reciprocal) for the softmax normalization.
        o_ref[0] = (acc_ref[...] / l_ref[...]).astype(o_ref.dtype)


# ---------------------------------------------------------------------------
# Host-side weight preparation
# ---------------------------------------------------------------------------
def _build_fused_weight(k_weight, cos, sin, head_size, h_pad):
    """Fused (M, 2*Hp) bf16 weight.

    [:, :Hp] = W^T (zero-padded)                    -> V = K(x), original order
    [:, Hp:] = (W^T @ R) * H**-0.25 (zero-padded)   -> rotated keys (== queries)

    R reproduces the module's in-place rotation including the aliasing quirk:
        new_even = even*cos + odd*sin
        new_odd  = -new_even*sin + odd*cos = -sin*cos*even + (cos - sin^2)*odd
    """
    H = head_size
    H2 = H // 2
    wt = jnp.asarray(k_weight, jnp.float32).T                     # (M, H)
    cos = jnp.asarray(cos, jnp.float32).reshape(H2)
    sin = jnp.asarray(sin, jnp.float32).reshape(H2)
    idx_e = jnp.arange(H2) * 2
    idx_o = idx_e + 1
    r = jnp.zeros((H, H), jnp.float32)
    r = r.at[idx_e, idx_e].set(cos)                               # new_even <- even
    r = r.at[idx_o, idx_e].set(sin)                               # new_even <- odd
    r = r.at[idx_e, idx_o].set(-sin * cos)                        # new_odd  <- even
    r = r.at[idx_o, idx_o].set(cos - sin * sin)                   # new_odd  <- odd
    w_rot = (wt @ r) * (float(H) ** -0.25)
    pad = ((0, 0), (0, h_pad - H))                                # lane-dense halves
    w_v = jnp.pad(wt, pad)
    w_k = jnp.pad(w_rot, pad)
    return jnp.concatenate([w_v, w_k], axis=1).astype(jnp.bfloat16)   # (M, 2*Hp)


# ---------------------------------------------------------------------------
# Wrapper
# ---------------------------------------------------------------------------
def rope_head_forward(x, k_weight, cos, sin, head_size, *, tq=None, tk=None, tp=None):
    """x: (B, T, n_model) f32; k_weight: (head_size, n_model) (PyTorch Linear).

    Returns (B, T, head_size) f32, matching RoPEHead.forward semantics.
    """
    B, T, M = x.shape
    H = head_size
    assert H % 2 == 0
    Hp = _round_up(H, _LANE)                       # lane-dense padded head dim

    tq = _choose_tile(T, 128 if tq is None else tq)
    tk = _choose_tile(T, 128 if tk is None else tk)
    tp = _choose_tile(T, 256 if tp is None else tp)
    nq, nk, nt = T // tq, T // tk, T // tp

    w_fused = _build_fused_weight(k_weight, cos, sin, H, Hp)      # (M, 2*Hp) bf16

    # ---- kernel 1: projection (once per token) -> bf16 k/v in HBM -----------
    proj_bytes = (2 * tp * M * 4                # x tile, double buffered
                  + M * 2 * Hp * 2              # fused weight (grid-invariant)
                  + 2 * 2 * tp * Hp * 2)        # two bf16 output tiles, dbl-buffered
    v_proj, k_proj = pl.pallas_call(
        functools.partial(_proj_kernel, h_pad=Hp),
        out_shape=(jax.ShapeDtypeStruct((B, T, Hp), jnp.bfloat16),
                   jax.ShapeDtypeStruct((B, T, Hp), jnp.bfloat16)),
        grid=(B, nt),
        in_specs=[
            pl.BlockSpec((1, tp, M), lambda b, t: (b, t, 0)),
            pl.BlockSpec((M, 2 * Hp), lambda b, t: (0, 0)),
        ],
        out_specs=(
            pl.BlockSpec((1, tp, Hp), lambda b, t: (b, t, 0)),
            pl.BlockSpec((1, tp, Hp), lambda b, t: (b, t, 0)),
        ),
        compiler_params=pltpu.CompilerParams(
            dimension_semantics=("parallel", "parallel"),
            vmem_limit_bytes=_vmem_limit(proj_bytes)),
    )(x, w_fused)

    # ---- kernel 2: causal flash attention ------------------------------------
    def q_map(b, qi, kj):
        return (b, qi, 0)

    def kv_map(b, qi, kj):
        # Clamp past-diagonal (fully masked) KV tiles to the diagonal tile so the
        # pipeline never fetches blocks whose compute is skipped by pl.when.
        last_needed = ((qi + 1) * tq - 1) // tk
        return (b, jnp.minimum(kj, last_needed), 0)

    def o_map(b, qi, kj):
        return (b, qi, 0)

    flash_bytes = (2 * tq * Hp * 2              # q tile (bf16), double buffered
                   + 2 * 3 * tk * Hp * 2        # k and v tiles, 3-deep buffering
                   + 2 * tq * Hp * 4            # f32 output tile, double buffered
                   + tq * Hp * 4                # acc scratch
                   + 2 * tq * _LANE * 4)        # m / l scratch (lane padded)
    out_padded = pl.pallas_call(
        functools.partial(_flash_kernel, tq=tq, tk=tk),
        out_shape=jax.ShapeDtypeStruct((B, T, Hp), jnp.float32),
        grid=(B, nq, nk),
        in_specs=[
            pl.BlockSpec((1, tq, Hp), q_map),   # queries == rotated keys (rows)
            pl.BlockSpec((1, tk, Hp), kv_map, pipeline_mode=pl.Buffered(3)),
            pl.BlockSpec((1, tk, Hp), kv_map, pipeline_mode=pl.Buffered(3)),
        ],
        out_specs=pl.BlockSpec((1, tq, Hp), o_map),
        scratch_shapes=[
            pltpu.VMEM((tq, 1), jnp.float32),   # running max  m
            pltpu.VMEM((tq, 1), jnp.float32),   # running sum  l
            pltpu.VMEM((tq, Hp), jnp.float32),  # output accumulator
        ],
        compiler_params=pltpu.CompilerParams(
            dimension_semantics=("parallel", "parallel", "arbitrary"),
            vmem_limit_bytes=_vmem_limit(flash_bytes)),
    )(k_proj, k_proj, v_proj)

    # Trim the zero-padded lanes back to head_size (padded V columns are exactly 0).
    return out_padded[..., :H]


# ---------------------------------------------------------------------------
# Pure-JAX reference reproducing the PyTorch forward exactly (f32)
# ---------------------------------------------------------------------------
def rope_head_reference(x, k_weight, cos, sin, head_size):
    kv = jnp.einsum('btm,hm->bth', x, k_weight)          # K(x); k = q = v = kv
    k1 = kv[..., 0::2]
    k2 = kv[..., 1::2]
    new_even = k1 * cos + k2 * sin
    new_odd = -new_even * sin + k2 * cos                 # in-place aliasing quirk
    k = jnp.stack([new_even, new_odd], axis=-1).reshape(kv.shape)
    v = kv
    w = jnp.einsum('bik,bjk->bij', k, k) * head_size ** -0.5
    T = x.shape[1]
    mask = jnp.triu(jnp.full((T, T), -jnp.inf), k=1)
    w = jax.nn.softmax(w + mask, axis=-1)
    return jnp.einsum('bij,bjk->bik', w, v)


if __name__ == "__main__":
    # Small config consistent with the module (seq length == n_context so the
    # registered causal mask broadcasts). tq=tk=64 gives 2 query x 2 KV tiles per
    # batch element, exercising the causal tile skip and the diagonal mask.
    B, n_context, n_model, head_size = 2, 128, 64, 32

    key = jax.random.PRNGKey(0)
    kx, kw = jax.random.split(key)
    x = jax.random.normal(kx, (B, n_context, n_model), dtype=jnp.float32)
    # nn.Linear(n_model, head_size, bias=False) stores weight (head_size, n_model).
    bound = 1.0 / (n_model ** 0.5)
    k_weight = jax.random.uniform(kw, (head_size, n_model), jnp.float32,
                                  minval=-bound, maxval=bound)

    # RoPE buffers (position-independent in the reference module).
    H2 = head_size // 2
    exponents = jnp.arange(H2, dtype=jnp.float32) / float(H2)
    thetas = 10000.0 ** (-exponents)
    cos = jnp.cos(thetas)
    sin = jnp.sin(thetas)

    out = rope_head_forward(x, k_weight, cos, sin, head_size, tq=64, tk=64)
    out = jax.block_until_ready(out)

    ref = rope_head_reference(x, k_weight, cos, sin, head_size)
    assert out.shape == (B, n_context, head_size)
    # bf16 MXU operands (f32 accumulation) -> relaxed tolerance vs f32 reference.
    err = float(jnp.max(jnp.abs(out - ref)))
    assert jnp.allclose(out, ref, atol=5e-2, rtol=5e-2), err

    print("KERNEL_OK")
</pallas_src>

<mosaic_0001>
module attributes {stable_mosaic.version = 11 : i64} {
  func.func @_proj_kernel(%arg0: i32, %arg1: i32, %arg2: memref<1x128x64xf32, #tpu.memory_space<vmem>>, %arg3: memref<64x256xbf16, #tpu.memory_space<vmem>>, %arg4: memref<1x128x128xbf16, #tpu.memory_space<vmem>>, %arg5: memref<1x128x128xbf16, #tpu.memory_space<vmem>>) attributes {dimension_semantics = [#tpu.dimension_semantics<parallel>, #tpu.dimension_semantics<parallel>], iteration_bounds = array<i64: 2, 1>, scalar_prefetch = 0 : i64, scratch_operands = 0 : i64, tpu.core_type = #tpu.core_type<tc>, window_params = [{transform_indices = @transform_0, window_bounds = array<i64: 1, 128, 64>}, {pipeline_mode = #tpu.pipeline_mode<synchronous>, transform_indices = @transform_1, window_bounds = array<i64: 64, 256>}, {transform_indices = @transform_2, window_bounds = array<i64: 1, 128, 128>}, {transform_indices = @transform_3, window_bounds = array<i64: 1, 128, 128>}]} {
    %c0 = arith.constant 0 : index
    %c0_0 = arith.constant 0 : index
    %c0_1 = arith.constant 0 : index
    %0 = vector.load %arg2[%c0, %c0_0, %c0_1] : memref<1x128x64xf32, #tpu.memory_space<vmem>>, vector<1x128x64xf32>
    %1 = vector.shape_cast %0 : vector<1x128x64xf32> to vector<128x64xf32>
    %2 = arith.truncf %1 : vector<128x64xf32> to vector<128x64xbf16>
    %c0_2 = arith.constant 0 : index
    %c0_3 = arith.constant 0 : index
    %3 = vector.load %arg3[%c0_2, %c0_3] : memref<64x256xbf16, #tpu.memory_space<vmem>>, vector<64x256xbf16>
    %cst = arith.constant dense<0.000000e+00> : vector<128x256xf32>
    %4 = tpu.matmul %2, %3, %cst {dimension_numbers = #tpu.dot_dimension_numbers<[1], [0], [0], [1], [0, 0, 1, 1], [], []>} : vector<128x64xbf16>, vector<64x256xbf16>, vector<128x256xf32> -> vector<128x256xf32>
    %5 = vector.extract_strided_slice %4 {offsets = [0, 0], sizes = [128, 128], strides = [1, 1]} : vector<128x256xf32> to vector<128x128xf32>
    %6 = arith.truncf %5 : vector<128x128xf32> to vector<128x128xbf16>
    %c0_4 = arith.constant 0 : index
    %c0_5 = arith.constant 0 : index
    %c0_6 = arith.constant 0 : index
    %7 = vector.load %arg4[%c0_4, %c0_5, %c0_6] : memref<1x128x128xbf16, #tpu.memory_space<vmem>>, vector<1x128x128xbf16>
    %8 = vector.shape_cast %7 : vector<1x128x128xbf16> to vector<128x128xbf16>
    %9 = vector.shape_cast %6 : vector<128x128xbf16> to vector<1x128x128xbf16>
    tpu.vector_store %arg4[%c0_4, %c0_5, %c0_6], %9 {strides = array<i32>} : memref<1x128x128xbf16, #tpu.memory_space<vmem>>, vector<1x128x128xbf16>,
    %10 = vector.extract_strided_slice %4 {offsets = [0, 128], sizes = [128, 128], strides = [1, 1]} : vector<128x256xf32> to vector<128x128xf32>
    %11 = arith.truncf %10 : vector<128x128xf32> to vector<128x128xbf16>
    %c0_7 = arith.constant 0 : index
    %c0_8 = arith.constant 0 : index
    %c0_9 = arith.constant 0 : index
    %12 = vector.load %arg5[%c0_7, %c0_8, %c0_9] : memref<1x128x128xbf16, #tpu.memory_space<vmem>>, vector<1x128x128xbf16>
    %13 = vector.shape_cast %12 : vector<1x128x128xbf16> to vector<128x128xbf16>
    %14 = vector.shape_cast %11 : vector<128x128xbf16> to vector<1x128x128xbf16>
    tpu.vector_store %arg5[%c0_7, %c0_8, %c0_9], %14 {strides = array<i32>} : memref<1x128x128xbf16, #tpu.memory_space<vmem>>, vector<1x128x128xbf16>,
    return
  }
  func.func @transform_0(%arg0: i32, %arg1: i32) -> (i32, i32, i32) {
    %c0_i32 = arith.constant 0 : i32
    %c0_i32_0 = arith.constant 0 : i32
    return %arg0, %arg1, %c0_i32 : i32, i32, i32
  }
  func.func @transform_1(%arg0: i32, %arg1: i32) -> (i32, i32) {
    %c0_i32 = arith.constant 0 : i32
    %c0_i32_0 = arith.constant 0 : i32
    %c0_i32_1 = arith.constant 0 : i32
    return %c0_i32, %c0_i32_0 : i32, i32
  }
  func.func @transform_2(%arg0: i32, %arg1: i32) -> (i32, i32, i32) {
    %c0_i32 = arith.constant 0 : i32
    %c0_i32_0 = arith.constant 0 : i32
    return %arg0, %arg1, %c0_i32 : i32, i32, i32
  }
  func.func @transform_3(%arg0: i32, %arg1: i32) -> (i32, i32, i32) {
    %c0_i32 = arith.constant 0 : i32
    %c0_i32_0 = arith.constant 0 : i32
    return %arg0, %arg1, %c0_i32 : i32, i32, i32
  }
}

</mosaic_0001>

<llo_original>
// kernel: tpu_custom_call.1
$region0: #{tpu_custom_call.1}
  #allocation0 [shape = 'u32[]', space=smem, size = 0x4, offset = 0x4, fixed_abs, tag = 'smem constant byte address 0x4 - core index']
  #allocation1 [shape = 'u32[144,128]{1,0:T(1,128)}', space=vmem, size = 0x12000, scoped, tag = 'internal scratch']
  %s0 = inlined_call_operand.vmem [shape: f32[2,128,64], index: 0, kind: input, shape index: {}]
  %s1 = inlined_call_operand.vmem [shape: bf16[64,256], index: 1, kind: input, shape index: {}]
  %s2 = inlined_call_operand.hbm [shape: bf16[2,128,128], index: 2, kind: output, shape index: {0}]
  %s3 = inlined_call_operand.hbm [shape: bf16[2,128,128], index: 3, kind: output, shape index: {1}]
  %4 = xla_tuple %s2, %s3
  %s5 = sld [smem:[#allocation0]]
  $region49: #{tpu_custom_call.1} parent=0
    _
  %s7 = ssub.s32 1, %s5
  %s8 = scalar_select 0, %s7, %s5
  $region1: #{tpu_custom_call.1} parent=0
    #allocation2 [shape = 'u8[65536]{0}', space=vmem, size = 0x10000, scoped, tag = 'output window, operand 0']
    #allocation3 [shape = 's32[2]{0}', space=sflag, size = 0x8, scoped, tag = 'scoped memory for tpu_custom_call.1']
    #allocation4 [shape = 'u8[65536]{0}', space=vmem, size = 0x10000, scoped, tag = 'output window, operand 1']
    #allocation5 [shape = 's32[2]{0}', space=sflag, size = 0x8, scoped, tag = 'scoped memory for tpu_custom_call.1']
    %9 = vsyncpa [#allocation3], 0
    %s10 = scalar_lea.sflag [#allocation3], 1
    %11 = vsyncpa %s10, 0
    %12 = vsyncpa [#allocation5], 0
    %s13 = scalar_lea.sflag [#allocation5], 1
    %14 = vsyncpa %s13, 0
    loop: start=0, step=1, limit=4
    $region2: #{tpu_custom_call.1} parent=1 // loop_pre_header
      _
    $region3: #{tpu_custom_call.1} parent=1 // loop_header
      %s16 = sphi 0, %s20
      %p17 = scmp.ge.s32.totalorder %s16, 4
      %s23 = sphi 0, %s35
      %s24 = sphi 0, %s31
      %s25 = sphi 0, %s23
      %s26 = sphi 0, %s24
      %s27 = sphi 0, %s25
      %s28 = sphi 0, %s26
      %s40 = sphi 0, %s42
      %s43 = sphi 0, %s40
      %s44 = sphi 0, %s43
      %s60 = sphi 0, %s44
      %s64 = sphi 0, %s64
      %s66 = sphi 0, %s64
      %s67 = sphi 0, %s66
      %s81 = sphi 0, %s67
      %s89 = sphi 0, %s91
      %s92 = sphi 0, %s89
      %s93 = sphi 0, %s92
      %s109 = sphi 0, %s93
      %s117 = sphi 0, %s119
      %s120 = sphi 0, %s117
      %s121 = sphi 0, %s120
      %s137 = sphi 0, %s121
    $region4: #{tpu_custom_call.1} parent=1 // loop_header_branch
      %19 = sbr.rel (%p17) target = $region8
    $region5: #{tpu_custom_call.1} parent=1 // loop_body
      %s21 = ssub.s32 %s16, 1
      %s22 = ssub.s32 %s16, 2
      %s29 = sadd.s32 1, %s24
      %p30 = scmp.ge.s32.totalorder %s29, 1
      %s31 = scalar_select %p30, 0, %s29
      %s32 = sadd.s32 1, %s23
      %s33 = scalar_select %p30, %s32, %s23
      %p34 = scmp.ge.s32.totalorder %s33, 2
      %s35 = scalar_select %p34, 0, %s33
      %s36 = ssub.s32 %s23, %s35
      %s37 = ssub.s32 %s24, %s31
      %s38 = sor.u32 %s36, %s37
      %p39 = scmp.eq.s32.totalorder %s38, 0
      %s41 = sadd.s32 %s40, 1
      %s42 = scalar_select %p39, %s40, %s41
      %p45 = pneg %p39
      %p46 = scmp.eq.s32.totalorder %s16, 1
      %p47 = por %p45, %p46
      %p48 = scmp.ne.s32.totalorder %s40, %s43
      %p49 = scmp.eq.s32.totalorder %s16, 0
      %p50 = por %p48, %p49
      %p51 = scmp.ne.s32.totalorder %s40, %s43
      %p52 = scmp.eq.s32.totalorder %s21, 1
      %p53 = por %p51, %p52
      %p54 = scmp.ne.s32.totalorder %s43, %s44
      %p55 = scmp.eq.s32.totalorder %s21, 0
      %p56 = por %p54, %p55
      %p57 = scmp.ne.s32.totalorder %s43, %s44
      %p58 = scmp.eq.s32.totalorder %s22, 1
      %p59 = por %p57, %p58
      %p61 = scmp.ne.s32.totalorder %s44, %s60
      %p62 = scmp.eq.s32.totalorder %s22, 0
      %p63 = por %p61, %p62
      %s65 = sadd.s32 %s64, 1
      %p68 = scmp.eq.s32.totalorder %s16, 1
      %p69 = scmp.ne.s32.totalorder %s64, %s66
      %p70 = scmp.eq.s32.totalorder %s16, 0
      %p71 = por %p69, %p70
      %p72 = scmp.ne.s32.totalorder %s64, %s66
      %p73 = scmp.eq.s32.totalorder %s21, 1
      %p74 = por %p72, %p73
      %p75 = scmp.ne.s32.totalorder %s66, %s67
      %p76 = scmp.eq.s32.totalorder %s21, 0
      %p77 = por %p75, %p76
      %p78 = scmp.ne.s32.totalorder %s66, %s67
      %p79 = scmp.eq.s32.totalorder %s22, 1
      %p80 = por %p78, %p79
      %p82 = scmp.ne.s32.totalorder %s67, %s81
      %p83 = scmp.eq.s32.totalorder %s22, 0
      %p84 = por %p82, %p83
      %s85 = ssub.s32 %s23, %s35
      %s86 = ssub.s32 %s24, %s31
      %s87 = sor.u32 %s85, %s86
      %p88 = scmp.eq.s32.totalorder %s87, 0
      %s90 = sadd.s32 %s89, 1
      %s91 = scalar_select %p88, %s89, %s90
      %p94 = pneg %p88
      %p95 = scmp.eq.s32.totalorder %s16, 1
      %p96 = por %p94, %p95
      %p97 = scmp.ne.s32.totalorder %s89, %s92
      %p98 = scmp.eq.s32.totalorder %s16, 0
      %p99 = por %p97, %p98
      %p100 = scmp.ne.s32.totalorder %s89, %s92
      %p101 = scmp.eq.s32.totalorder %s21, 1
      %p102 = por %p100, %p101
      %p103 = scmp.ne.s32.totalorder %s92, %s93
      %p104 = scmp.eq.s32.totalorder %s21, 0
      %p105 = por %p103, %p104
      %p106 = scmp.ne.s32.totalorder %s92, %s93
      %p107 = scmp.eq.s32.totalorder %s22, 1
      %p108 = por %p106, %p107
      %p110 = scmp.ne.s32.totalorder %s93, %s109
      %p111 = scmp.eq.s32.totalorder %s22, 0
      %p112 = por %p110, %p111
      %s113 = ssub.s32 %s23, %s35
      %s114 = ssub.s32 %s24, %s31
      %s115 = sor.u32 %s113, %s114
      %p116 = scmp.eq.s32.totalorder %s115, 0
      %s118 = sadd.s32 %s117, 1
      %s119 = scalar_select %p116, %s117, %s118
      %p122 = pneg %p116
      %p123 = scmp.eq.s32.totalorder %s16, 1
      %p124 = por %p122, %p123
      %p125 = scmp.ne.s32.totalorder %s117, %s120
      %p126 = scmp.eq.s32.totalorder %s16, 0
      %p127 = por %p125, %p126
      %p128 = scmp.ne.s32.totalorder %s117, %s120
      %p129 = scmp.eq.s32.totalorder %s21, 1
      %p130 = por %p128, %p129
      %p131 = scmp.ne.s32.totalorder %s120, %s121
      %p132 = scmp.eq.s32.totalorder %s21, 0
      %p133 = por %p131, %p132
      %p134 = scmp.ne.s32.totalorder %s120, %s121
      %p135 = scmp.eq.s32.totalorder %s22, 1
      %p136 = por %p134, %p135
      %p138 = scmp.ne.s32.totalorder %s121, %s137
      %p139 = scmp.eq.s32.totalorder %s22, 0
      %p140 = por %p138, %p139
      %p141 = scmp.le.s32.totalorder 1, %s16
      %p142 = scmp.lt.s32.totalorder %s16, 3
      %p143 = pnand %p141, %p142
      %p144 = pneg %p143
      // Predicated region
      $region9: #{tpu_custom_call.1} parent=5 // pred_check
        _
      $region10: #{tpu_custom_call.1} parent=5 // pred_check_branch
        %146 = sbr.rel (%p143) target = $region12
      $region11: #{tpu_custom_call.1} parent=5 // pred_region
        %s147 = ssub.s32 %s16, 1
        // Predicated region
        $region13: #{tpu_custom_call.1} parent=11 // pred_check
          %p148 = pneg %p77
        $region14: #{tpu_custom_call.1} parent=11 // pred_check_branch
          %150 = sbr.rel (%p148) target = $region16
        $region15: #{tpu_custom_call.1} parent=11 // pred_region
          _
        $region16: #{tpu_custom_call.1} parent=11 // pred_fallthru
          _
      $region12: #{tpu_custom_call.1} parent=5 // pred_fallthru
        _
      %p151 = scmp.lt.s32.totalorder %s16, 2
      // Predicated region
      $region17: #{tpu_custom_call.1} parent=5 // pred_check
        %p152 = pneg %p151
      $region18: #{tpu_custom_call.1} parent=5 // pred_check_branch
        %154 = sbr.rel (%p152) target = $region20
      $region19: #{tpu_custom_call.1} parent=5 // pred_region
        // Predicated region
        $region21: #{tpu_custom_call.1} parent=19 // pred_check
          %p155 = pneg %p50
        $region22: #{tpu_custom_call.1} parent=19 // pred_check_branch
          %157 = sbr.rel (%p155) target = $region24
        $region23: #{tpu_custom_call.1} parent=19 // pred_region
          %s158 = smul.u32 16, %s24
          %p159 = scmp.lt.s32.totalorder %s23, 1
          %s160 = scalar_select %p159, %s23, 1
          %p161 = scmp.lt.s32.totalorder %s158, 15
          %s162 = scalar_select %p161, %s158, 15
          %s163 = smul.addr %s160, 16
          %s164 = sadd.s32 %s162, %s163
          %s165 = smul.addr %s164, 8
          %s166 = scalar_lea.vmem %s0, %s165
          %s167 = smul.u32 16, %s24
        $region24: #{tpu_custom_call.1} parent=19 // pred_fallthru
          _
      $region20: #{tpu_custom_call.1} parent=5 // pred_fallthru
        _
      %p168 = scmp.le.s32.totalorder 1, %s16
      %p169 = scmp.lt.s32.totalorder %s16, 3
      %p170 = pnand %p168, %p169
      %p171 = pneg %p170
      // Predicated region
      $region25: #{tpu_custom_call.1} parent=5 // pred_check
        _
      $region26: #{tpu_custom_call.1} parent=5 // pred_check_branch
        %173 = sbr.rel (%p170) target = $region28
      $region27: #{tpu_custom_call.1} parent=5 // pred_region
        %s174 = ssub.s32 %s16, 1
        %s175 = smul.u32 16, %s26
        %p176 = scmp.lt.s32.totalorder %s25, 1
        %s177 = scalar_select %p176, %s25, 1
        %p178 = scmp.lt.s32.totalorder %s175, 15
        %s179 = scalar_select %p178, %s175, 15
        %s180 = smul.addr %s177, 16
        %s181 = sadd.s32 %s179, %s180
        %s182 = smul.addr %s181, 8
        %s183 = scalar_lea.vmem %s0, %s182
        %p184 = pneg %p56
        %p185 = pneg %p53
        %p186 = pneg %p77
        %p187 = pneg %p74
        %p188 = pneg %p105
        %p189 = pneg %p102
        %s190 = sand.u32 %s92, 1
        %s191 = scalar_lea.sflag [#allocation3], %s190
        %s192 = sand.u32 %s92, 1
        %s193 = smul.addr %s192, 64
        %s194 = scalar_lea.vmem [#allocation2], %s193
        %p195 = pneg %p133
        %p196 = pneg %p130
        %s197 = sand.u32 %s120, 1
        %s198 = scalar_lea.sflag [#allocation5], %s197
        %s199 = sand.u32 %s120, 1
        %s200 = smul.addr %s199, 64
        %s201 = scalar_lea.vmem [#allocation4], %s200
        %s202 = smul.u32 16, %s26
        %p203 = scmp.lt.s32.totalorder %s25, 1
        %s204 = scalar_select %p203, %s25, 1
        %p205 = scmp.lt.s32.totalorder %s202, 15
        %s206 = scalar_select %p205, %s202, 15
        %s207 = smul.addr %s204, 16
        %s208 = sadd.s32 %s206, %s207
        %s209 = smul.addr %s208, 8
        %s210 = scalar_lea.vmem %s0, %s209
        %s211 = smul.u32 16, %s26
        %s212 = smul.u32 16, %s26
        %s213 = smul.u32 16, %s26
        %v215 = vld [vmem:[%s210] sm:$0xff]
        %v216 = vld [vmem:[%s210 + $0x8] sm:$0xff]
        %v217 = vld [vmem:[%s210 + $0x10] sm:$0xff]
        %v218 = vld [vmem:[%s210 + $0x18] sm:$0xff]
        %v219 = vld [vmem:[%s210 + $0x20] sm:$0xff]
        %v220 = vld [vmem:[%s210 + $0x28] sm:$0xff]
        %v221 = vld [vmem:[%s210 + $0x30] sm:$0xff]
        %v222 = vld [vmem:[%s210 + $0x38] sm:$0xff]
        %v223 = vld [vmem:[%s210 + $0x40] sm:$0xff]
        %v224 = vld [vmem:[%s210 + $0x48] sm:$0xff]
        %v225 = vld [vmem:[%s210 + $0x50] sm:$0xff]
        %v226 = vld [vmem:[%s210 + $0x58] sm:$0xff]
        %v227 = vld [vmem:[%s210 + $0x60] sm:$0xff]
        %v228 = vld [vmem:[%s210 + $0x68] sm:$0xff]
        %v229 = vld [vmem:[%s210 + $0x70] sm:$0xff]
        %v230 = vld [vmem:[%s210 + $0x78] sm:$0xff]
        %v231 = vpack.c.bf16 %v216, %v215
        %v232 = vpack.c.bf16 %v218, %v217
        %v233 = vpack.c.bf16 %v220, %v219
        %v234 = vpack.c.bf16 %v222, %v221
        %v235 = vpack.c.bf16 %v224, %v223
        %v236 = vpack.c.bf16 %v226, %v225
        %v237 = vpack.c.bf16 %v228, %v227
        %v238 = vpack.c.bf16 %v230, %v229
        %v239 = vld [vmem:[%s1] sm:$0xff]
        %v240 = vld [vmem:[%s1 + $0x8] sm:$0xff]
        %v241 = vld [vmem:[%s1 + $0x10] sm:$0xff]
        %v242 = vld [vmem:[%s1 + $0x18] sm:$0xff]
        %v243 = vld [vmem:[%s1 + $0x20] sm:$0xff]
        %v244 = vld [vmem:[%s1 + $0x28] sm:$0xff]
        %v245 = vld [vmem:[%s1 + $0x30] sm:$0xff]
        %v246 = vld [vmem:[%s1 + $0x38] sm:$0xff]
        %v255 = vunpack.c.l.b16 %v239
        %v256 = vunpack.c.h.b16 %v239
        %v257 = vunpack.c.l.b16 %v240
        %v258 = vunpack.c.h.b16 %v240
        %v259 = vunpack.c.l.b16 %v241
        %v260 = vunpack.c.h.b16 %v241
        %v261 = vunpack.c.l.b16 %v242
        %v262 = vunpack.c.h.b16 %v242
        %v263 = vunpack.c.l.b16 %v243
        %v264 = vunpack.c.h.b16 %v243
        %v265 = vunpack.c.l.b16 %v244
        %v266 = vunpack.c.h.b16 %v244
        %v267 = vunpack.c.l.b16 %v245
        %v268 = vunpack.c.h.b16 %v245
        %v269 = vunpack.c.l.b16 %v246
        %v270 = vunpack.c.h.b16 %v246
        %v271 = vpack.c.b16 %v257, %v255
        %v272 = vpack.c.b16 %v258, %v256
        %v273 = vpack.c.b16 %v261, %v259
        %v274 = vpack.c.b16 %v262, %v260
        %v275 = vpack.c.b16 %v265, %v263
        %v276 = vpack.c.b16 %v266, %v264
        %v277 = vpack.c.b16 %v269, %v267
        %v278 = vpack.c.b16 %v270, %v268
        %vm287 = vcmask 523264
        %v289 = vsel %vm287, %v231, 0
        %v292 = vsel %vm287, %v232, 0
        %v295 = vsel %vm287, %v233, 0
        %v298 = vsel %vm287, %v234, 0
        %v301 = vsel %vm287, %v235, 0
        %v304 = vsel %vm287, %v236, 0
        %v307 = vsel %vm287, %v237, 0
        %v310 = vsel %vm287, %v238, 0
        %312 = vmatprep.subr.bf16.mxu0 0
        %313 = vmatpush1.bf16.msra.mxu0 0
        %314 = vmatprep.subr.bf16.mxu0 0
        %315 = vmatpush1.bf16.msra.mxu0 0
        %316 = vmatprep.subr.bf16.mxu0 0
        %317 = vmatpush1.bf16.msra.mxu0 0
        %318 = vmatprep.subr.bf16.mxu0 0
        %319 = vmatpush1.bf16.msra.mxu0 0
        %320 = vmatprep.subr.bf16.mxu0 %v278
        %321 = vmatpush1.bf16.msra.mxu0 %v277
        %322 = vmatprep.subr.bf16.mxu0 %v276
        %323 = vmatpush1.bf16.msra.mxu0 %v275
        %324 = vmatprep.subr.bf16.mxu0 %v274
        %325 = vmatpush1.bf16.msra.mxu0 %v273
        %326 = vmatprep.subr.bf16.mxu0 %v272
        %327 = vmatpush1.bf16.msra.mxu0 %v271
        %328 = vmatprep.subr.bf16.mxu0 0
        %329 = vmatpush2.bf16.msra.mxu0 0
        %330 = vmatprep.subr.bf16.mxu0 0
        %331 = vmatpush2.bf16.msra.mxu0 0
        %332 = vmatprep.subr.bf16.mxu0 0
        %333 = vmatpush2.bf16.msra.mxu0 0
        %334 = vmatprep.subr.bf16.mxu0 0
        %335 = vmatpush2.bf16.msra.mxu0 0
        %336 = vmatprep.subr.bf16.mxu0 0
        %337 = vmatpush2.bf16.msra.mxu0 0
        %338 = vmatprep.subr.bf16.mxu0 0
        %339 = vmatpush2.bf16.msra.mxu0 0
        %340 = vmatprep.subr.bf16.mxu0 0
        %341 = vmatpush2.bf16.msra.mxu0 0
        %342 = vmatprep.subr.bf16.mxu0 0
        %343 = vmatpush2.bf16.msra.mxu0 0
        %344 = vmatprep.mubr.bf16.mxu0 0
        %345 = vmatmul.mubr.bf16.gmra.mxu0 %v289
        %v346 = vpop.f32.mrf.mxu0
        %v347 = vadd.f32 0.0, %v346
        %v348 = vpop.f32.mrf.mxu0
        %v349 = vadd.f32 0.0, %v348
        %v350 = vpop.f32.mrf.mxu0
        %v351 = vadd.f32 0.0, %v350
        %v352 = vpop.f32.mrf.mxu0
        %v353 = vadd.f32 0.0, %v352
        %354 = vmatprep.mubr.bf16.mxu0 0
        %355 = vmatmul.mubr.bf16.gmra.mxu0 %v292
        %v356 = vpop.f32.mrf.mxu0
        %v357 = vadd.f32 0.0, %v356
        %v358 = vpop.f32.mrf.mxu0
        %v359 = vadd.f32 0.0, %v358
        %v360 = vpop.f32.mrf.mxu0
        %v361 = vadd.f32 0.0, %v360
        %v362 = vpop.f32.mrf.mxu0
        %v363 = vadd.f32 0.0, %v362
        %364 = vmatprep.mubr.bf16.mxu0 0
        %365 = vmatmul.mubr.bf16.gmra.mxu0 %v295
        %v366 = vpop.f32.mrf.mxu0
        %v367 = vadd.f32 0.0, %v366
        %v368 = vpop.f32.mrf.mxu0
        %v369 = vadd.f32 0.0, %v368
        %v370 = vpop.f32.mrf.mxu0
        %v371 = vadd.f32 0.0, %v370
        %v372 = vpop.f32.mrf.mxu0
        %v373 = vadd.f32 0.0, %v372
        %374 = vmatprep.mubr.bf16.mxu0 0
        %375 = vmatmul.mubr.bf16.gmra.mxu0 %v298
        %v376 = vpop.f32.mrf.mxu0
        %v377 = vadd.f32 0.0, %v376
        %v378 = vpop.f32.mrf.mxu0
        %v379 = vadd.f32 0.0, %v378
        %v380 = vpop.f32.mrf.mxu0
        %v381 = vadd.f32 0.0, %v380
        %v382 = vpop.f32.mrf.mxu0
        %v383 = vadd.f32 0.0, %v382
        %384 = vmatprep.mubr.bf16.mxu0 0
        %385 = vmatmul.mubr.bf16.gmra.mxu0 %v301
        %v386 = vpop.f32.mrf.mxu0
        %v387 = vadd.f32 0.0, %v386
        %v388 = vpop.f32.mrf.mxu0
        %v389 = vadd.f32 0.0, %v388
        %v390 = vpop.f32.mrf.mxu0
        %v391 = vadd.f32 0.0, %v390
        %v392 = vpop.f32.mrf.mxu0
        %v393 = vadd.f32 0.0, %v392
        %394 = vmatprep.mubr.bf16.mxu0 0
        %395 = vmatmul.mubr.bf16.gmra.mxu0 %v304
        %v396 = vpop.f32.mrf.mxu0
        %v397 = vadd.f32 0.0, %v396
        %v398 = vpop.f32.mrf.mxu0
        %v399 = vadd.f32 0.0, %v398
        %v400 = vpop.f32.mrf.mxu0
        %v401 = vadd.f32 0.0, %v400
        %v402 = vpop.f32.mrf.mxu0
        %v403 = vadd.f32 0.0, %v402
        %404 = vmatprep.mubr.bf16.mxu0 0
        %405 = vmatmul.mubr.bf16.gmra.mxu0 %v307
        %v406 = vpop.f32.mrf.mxu0
        %v407 = vadd.f32 0.0, %v406
        %v408 = vpop.f32.mrf.mxu0
        %v409 = vadd.f32 0.0, %v408
        %v410 = vpop.f32.mrf.mxu0
        %v411 = vadd.f32 0.0, %v410
        %v412 = vpop.f32.mrf.mxu0
        %v413 = vadd.f32 0.0, %v412
        %414 = vmatprep.mubr.bf16.mxu0 0
        %415 = vmatmul.mubr.bf16.gmra.mxu0 %v310
        %v416 = vpop.f32.mrf.mxu0
        %v417 = vadd.f32 0.0, %v416
        %v418 = vpop.f32.mrf.mxu0
        %v419 = vadd.f32 0.0, %v418
        %v420 = vpop.f32.mrf.mxu0
        %v421 = vadd.f32 0.0, %v420
        %v422 = vpop.f32.mrf.mxu0
        %v423 = vadd.f32 0.0, %v422
        %424 = vdwg.mxu0
        %v425 = vpack.c.bf16 %v351, %v347
        %v426 = vpack.c.bf16 %v361, %v357
        %v427 = vpack.c.bf16 %v371, %v367
        %v428 = vpack.c.bf16 %v381, %v377
        %v429 = vpack.c.bf16 %v391, %v387
        %v430 = vpack.c.bf16 %v401, %v397
        %v431 = vpack.c.bf16 %v411, %v407
        %v432 = vpack.c.bf16 %v421, %v417
        %v441 = vunpack.c.l.b16 %v425
        %v442 = vunpack.c.h.b16 %v425
        %v443 = vunpack.c.l.b16 %v426
        %v444 = vunpack.c.h.b16 %v426
        %v445 = vunpack.c.l.b16 %v427
        %v446 = vunpack.c.h.b16 %v427
        %v447 = vunpack.c.l.b16 %v428
        %v448 = vunpack.c.h.b16 %v428
        %v449 = vunpack.c.l.b16 %v429
        %v450 = vunpack.c.h.b16 %v429
        %v451 = vunpack.c.l.b16 %v430
        %v452 = vunpack.c.h.b16 %v430
        %v453 = vunpack.c.l.b16 %v431
        %v454 = vunpack.c.h.b16 %v431
        %v455 = vunpack.c.l.b16 %v432
        %v456 = vunpack.c.h.b16 %v432
        %v457 = vpack.c.b16 %v441, %v441
        %v458 = vpack.c.b16 %v442, %v442
        %v459 = vpack.c.b16 %v443, %v443
        %v460 = vpack.c.b16 %v444, %v444
        %v461 = vpack.c.b16 %v445, %v445
        %v462 = vpack.c.b16 %v446, %v446
        %v463 = vpack.c.b16 %v447, %v447
        %v464 = vpack.c.b16 %v448, %v448
        %v465 = vpack.c.b16 %v449, %v449
        %v466 = vpack.c.b16 %v450, %v450
        %v467 = vpack.c.b16 %v451, %v451
        %v468 = vpack.c.b16 %v452, %v452
        %v469 = vpack.c.b16 %v453, %v453
        %v470 = vpack.c.b16 %v454, %v454
        %v471 = vpack.c.b16 %v455, %v455
        %v472 = vpack.c.b16 %v456, %v456
        %489 = vst [vmem:[%s194] sm:$0xf] %v457
        %490 = vst [vmem:[%s194 + $0x4] sm:$0xf] %v458
        %491 = vst [vmem:[%s194 + $0x8] sm:$0xf] %v459
        %492 = vst [vmem:[%s194 + $0xc] sm:$0xf] %v460
        %493 = vst [vmem:[%s194 + $0x10] sm:$0xf] %v461
        %494 = vst [vmem:[%s194 + $0x14] sm:$0xf] %v462
        %495 = vst [vmem:[%s194 + $0x18] sm:$0xf] %v463
        %496 = vst [vmem:[%s194 + $0x1c] sm:$0xf] %v464
        %497 = vst [vmem:[%s194 + $0x20] sm:$0xf] %v465
        %498 = vst [vmem:[%s194 + $0x24] sm:$0xf] %v466
        %499 = vst [vmem:[%s194 + $0x28] sm:$0xf] %v467
        %500 = vst [vmem:[%s194 + $0x2c] sm:$0xf] %v468
        %501 = vst [vmem:[%s194 + $0x30] sm:$0xf] %v469
        %502 = vst [vmem:[%s194 + $0x34] sm:$0xf] %v470
        %503 = vst [vmem:[%s194 + $0x38] sm:$0xf] %v471
        %504 = vst [vmem:[%s194 + $0x3c] sm:$0xf] %v472
        %v505 = vpack.c.bf16 %v353, %v349
        %v506 = vpack.c.bf16 %v363, %v359
        %v507 = vpack.c.bf16 %v373, %v369
        %v508 = vpack.c.bf16 %v383, %v379
        %v509 = vpack.c.bf16 %v393, %v389
        %v510 = vpack.c.bf16 %v403, %v399
        %v511 = vpack.c.bf16 %v413, %v409
        %v512 = vpack.c.bf16 %v423, %v419
        %v521 = vunpack.c.l.b16 %v505
        %v522 = vunpack.c.h.b16 %v505
        %v523 = vunpack.c.l.b16 %v506
        %v524 = vunpack.c.h.b16 %v506
        %v525 = vunpack.c.l.b16 %v507
        %v526 = vunpack.c.h.b16 %v507
        %v527 = vunpack.c.l.b16 %v508
        %v528 = vunpack.c.h.b16 %v508
        %v529 = vunpack.c.l.b16 %v509
        %v530 = vunpack.c.h.b16 %v509
        %v531 = vunpack.c.l.b16 %v510
        %v532 = vunpack.c.h.b16 %v510
        %v533 = vunpack.c.l.b16 %v511
        %v534 = vunpack.c.h.b16 %v511
        %v535 = vunpack.c.l.b16 %v512
        %v536 = vunpack.c.h.b16 %v512
        %v537 = vpack.c.b16 %v521, %v521
        %v538 = vpack.c.b16 %v522, %v522
        %v539 = vpack.c.b16 %v523, %v523
        %v540 = vpack.c.b16 %v524, %v524
        %v541 = vpack.c.b16 %v525, %v525
        %v542 = vpack.c.b16 %v526, %v526
        %v543 = vpack.c.b16 %v527, %v527
        %v544 = vpack.c.b16 %v528, %v528
        %v545 = vpack.c.b16 %v529, %v529
        %v546 = vpack.c.b16 %v530, %v530
        %v547 = vpack.c.b16 %v531, %v531
        %v548 = vpack.c.b16 %v532, %v532
        %v549 = vpack.c.b16 %v533, %v533
        %v550 = vpack.c.b16 %v534, %v534
        %v551 = vpack.c.b16 %v535, %v535
        %v552 = vpack.c.b16 %v536, %v536
        %569 = vst [vmem:[%s201] sm:$0xf] %v537
        %570 = vst [vmem:[%s201 + $0x4] sm:$0xf] %v538
        %571 = vst [vmem:[%s201 + $0x8] sm:$0xf] %v539
        %572 = vst [vmem:[%s201 + $0xc] sm:$0xf] %v540
        %573 = vst [vmem:[%s201 + $0x10] sm:$0xf] %v541
        %574 = vst [vmem:[%s201 + $0x14] sm:$0xf] %v542
        %575 = vst [vmem:[%s201 + $0x18] sm:$0xf] %v543
        %576 = vst [vmem:[%s201 + $0x1c] sm:$0xf] %v544
        %577 = vst [vmem:[%s201 + $0x20] sm:$0xf] %v545
        %578 = vst [vmem:[%s201 + $0x24] sm:$0xf] %v546
        %579 = vst [vmem:[%s201 + $0x28] sm:$0xf] %v547
        %580 = vst [vmem:[%s201 + $0x2c] sm:$0xf] %v548
        %581 = vst [vmem:[%s201 + $0x30] sm:$0xf] %v549
        %582 = vst [vmem:[%s201 + $0x34] sm:$0xf] %v550
        %583 = vst [vmem:[%s201 + $0x38] sm:$0xf] %v551
        %584 = vst [vmem:[%s201 + $0x3c] sm:$0xf] %v552
        %s585 = sand.u32 %s92, 1
        %s586 = scalar_lea.sflag [#allocation3], %s585
        %s587 = sand.u32 %s92, 1
        %s588 = smul.addr %s587, 64
        %s589 = scalar_lea.vmem [#allocation2], %s588
        %s590 = sand.u32 %s120, 1
        %s591 = scalar_lea.sflag [#allocation5], %s590
        %s592 = sand.u32 %s120, 1
        %s593 = smul.addr %s592, 64
        %s594 = scalar_lea.vmem [#allocation4], %s593
        // Predicated region
        $region29: #{tpu_custom_call.1} parent=27 // pred_check
          %p595 = pneg %p102
        $region30: #{tpu_custom_call.1} parent=27 // pred_check_branch
          %597 = sbr.rel (%p595) target = $region32
        $region31: #{tpu_custom_call.1} parent=27 // pred_region
          %s598 = smul.u32 16, %s26
          %s600 = ssub.s32 1024, 1024
          %601 = vsyncadd %s586, %s600
          %s602 = smul.addr %s25, 16
          %s603 = sadd.s32 %s598, %s602
          %s604 = smul.addr %s603, 64
          %s605 = scalar_lea.hbm %s2, %s604
          %s606 = sshll.u32 %s589, 4
          %s607 = int_to_ptr.vmem [resolvable:$true] %s606
          %612 = dma.vmem_to_hbm [thread:$0]  %s607, 1024, %s605, %s586, 64, 64, 4
        $region32: #{tpu_custom_call.1} parent=27 // pred_fallthru
          _
        // Predicated region
        $region33: #{tpu_custom_call.1} parent=27 // pred_check
          %p613 = pneg %p130
        $region34: #{tpu_custom_call.1} parent=27 // pred_check_branch
          %615 = sbr.rel (%p613) target = $region36
        $region35: #{tpu_custom_call.1} parent=27 // pred_region
          %s616 = smul.u32 16, %s26
          %s618 = ssub.s32 1024, 1024
          %619 = vsyncadd %s591, %s618
          %s620 = smul.addr %s25, 16
          %s621 = sadd.s32 %s616, %s620
          %s622 = smul.addr %s621, 64
          %s623 = scalar_lea.hbm %s3, %s622
          %s624 = sshll.u32 %s594, 4
          %s625 = int_to_ptr.vmem [resolvable:$true] %s624
          %630 = dma.vmem_to_hbm [thread:$0]  %s625, 1024, %s623, %s591, 64, 64, 4
        $region36: #{tpu_custom_call.1} parent=27 // pred_fallthru
          _
      $region28: #{tpu_custom_call.1} parent=5 // pred_fallthru
        _
      %p631 = scmp.le.s32.totalorder 2, %s16
      // Predicated region
      $region37: #{tpu_custom_call.1} parent=5 // pred_check
        %p632 = pneg %p631
      $region38: #{tpu_custom_call.1} parent=5 // pred_check_branch
        %634 = sbr.rel (%p632) target = $region40
      $region39: #{tpu_custom_call.1} parent=5 // pred_region
        %s635 = ssub.s32 %s16, 2
        // Predicated region
        $region41: #{tpu_custom_call.1} parent=39 // pred_check
          %p636 = pneg %p108
        $region42: #{tpu_custom_call.1} parent=39 // pred_check_branch
          %638 = sbr.rel (%p636) target = $region44
        $region43: #{tpu_custom_call.1} parent=39 // pred_region
          %s639 = sand.u32 %s93, 1
          %s640 = scalar_lea.sflag [#allocation3], %s639
          %s641 = sand.u32 %s93, 1
          %s642 = smul.addr %s641, 64
          %s643 = scalar_lea.vmem [#allocation2], %s642
          %644 = dma.done %s640, 1024
        $region44: #{tpu_custom_call.1} parent=39 // pred_fallthru
          _
        // Predicated region
        $region45: #{tpu_custom_call.1} parent=39 // pred_check
          %p645 = pneg %p136
        $region46: #{tpu_custom_call.1} parent=39 // pred_check_branch
          %647 = sbr.rel (%p645) target = $region48
        $region47: #{tpu_custom_call.1} parent=39 // pred_region
          %s648 = sand.u32 %s121, 1
          %s649 = scalar_lea.sflag [#allocation5], %s648
          %s650 = sand.u32 %s121, 1
          %s651 = smul.addr %s650, 64
          %s652 = scalar_lea.vmem [#allocation4], %s651
          %653 = dma.done %s649, 1024
        $region48: #{tpu_custom_call.1} parent=39 // pred_fallthru
          _
      $region40: #{tpu_custom_call.1} parent=5 // pred_fallthru
        _
    $region6: #{tpu_custom_call.1} parent=1 // loop_footer
      %s20 = sadd.s32 1, %s16
    $region7: #{tpu_custom_call.1} parent=1 // loop_footer_branch
      %15 = sbr.rel target = $region3
    $region8: #{tpu_custom_call.1} parent=1 // loop_exit
      _
    %654 = vsyncpa [#allocation3], 1
    %s655 = scalar_lea.sflag [#allocation3], 1
    %656 = vsyncpa %s655, 1
    %657 = vsyncpa [#allocation5], 1
    %s658 = scalar_lea.sflag [#allocation5], 1
    %659 = vsyncpa %s658, 1

</llo_original>
